<compile_context>
chip_gen: v7x
topology: tpu7x:2x2x1
jax: 0.10.0
libtpu: 0.0.40
codegen_flags: <defaults>
</compile_context>

<pallas_src>
import jax
import jax.numpy as jnp
from jax.experimental import pallas as pl
from jax.experimental.pallas import tpu as pltpu


def _round_up(x, m):
    return ((x + m - 1) // m) * m


def grayscale_kernel(x_ref, o_ref):
    # x_ref: (C, th, W) tile in VMEM.  Reduce over the leading channel axis
    # (plain VPU adds, no cross-lane work), divide by 3, cast to output dtype.
    # f32 accumulation is safe on v5e (no bf16 VPU) and free here (DMA-bound).
    s = jnp.sum(x_ref[...], axis=0, keepdims=True, dtype=jnp.float32)
    o_ref[...] = (s / 3.0).astype(o_ref.dtype)


def _chip_info():
    """Returns (physical VMEM bytes per core, has-two-TensorCores)."""
    cap = 64 * 1024 * 1024  # conservative default = v7x per-TC VMEM
    try:
        info = pltpu.get_tpu_info()
        cap = int(getattr(info, "vmem_capacity_bytes", cap))
    except Exception:
        info = None
    # Try explicit core-count attributes first, then fall back to the VMEM
    # heuristic: v7x exposes 64 MiB per TC and has 2 TCs/chip; v5e/v6e have
    # 128 MiB and a single TC.
    two_tc = None
    if info is not None:
        for attr in ("num_tensorcores", "tensorcores_per_chip", "num_cores"):
            v = getattr(info, attr, None)
            if isinstance(v, int) and v > 0:
                two_tc = v >= 2
                break
    if two_tc is None:
        two_tc = cap <= 64 * 1024 * 1024
    return cap, two_tc


def my_grayscale(img):
    """Pallas equivalent of MyGrayscale.forward."""
    C, H, W = img.shape
    in_dtype = img.dtype
    # torch.sum(int)/3 promotes to float; keep float dtypes as-is.
    out_dtype = in_dtype if jnp.issubdtype(in_dtype, jnp.floating) else jnp.float32
    itemsize = jnp.dtype(in_dtype).itemsize
    out_itemsize = jnp.dtype(out_dtype).itemsize
    # Minimum sublane tile for this dtype (f32: 8, bf16: 16, int8/uint8: 32).
    sub = {4: 8, 2: 16, 1: 32}.get(itemsize, 8)

    cap, two_tc = _chip_info()

    # Row tile: target a ~3 MiB input block (C, th, W); beyond a few MiB the
    # HBM roofline is already saturated and larger blocks only squeeze VMEM.
    target_block_bytes = 3 * 1024 * 1024
    bytes_per_row = max(1, C * W * itemsize)
    th = max(sub, (target_block_bytes // bytes_per_row) // sub * sub)

    if th >= H:
        # Whole image fits in one block (block dim == full array dim is legal
        # without any sublane-divisibility requirement).
        th = H
        steps = 1
        if two_tc and H > sub:
            # Split across the two TensorCores.
            th = max(sub, _round_up(pl.cdiv(H, 2), sub))
            steps = pl.cdiv(H, th)
    else:
        steps = pl.cdiv(H, th)
        if two_tc and 1 < steps < 8 and steps % 2 == 1:
            # Balance the megacore-sharded axis: prefer an even step count so
            # neither TensorCore sits idle on the tail.
            th = max(sub, _round_up(pl.cdiv(H, steps + 1), sub))
            steps = pl.cdiv(H, th)
    grid = (steps,)

    # Deeper input pipeline once blocks are small and there are enough steps.
    def _in_spec():
        if steps >= 3:
            try:
                return pl.BlockSpec((C, th, W), lambda i: (0, i, 0),
                                    pipeline_mode=pl.Buffered(3))
            except TypeError:  # older API without pipeline_mode
                pass
        return pl.BlockSpec((C, th, W), lambda i: (0, i, 0))

    in_spec = _in_spec()
    out_spec = pl.BlockSpec((1, th, W), lambda i: (0, i, 0))

    # Scoped-VMEM limit from the actual block footprint (+ headroom), capped at
    # the chip's physical VMEM.  Prevents v5e's 16 MiB default from shrinking
    # the tiles while not over-reserving on any generation.
    n_in_buf = 3 if steps >= 3 else 2
    in_block = C * th * W * itemsize
    out_block = th * W * out_itemsize
    f32_tmp = (C + 1) * th * W * 4
    footprint = n_in_buf * in_block + 2 * out_block + f32_tmp
    vmem_limit = int(min(cap, max(footprint + 16 * 1024 * 1024,
                                  32 * 1024 * 1024)))

    cost = pl.CostEstimate(
        flops=C * H * W,                                        # (C-1) adds + 1 div per output
        transcendentals=0,
        bytes_accessed=C * H * W * itemsize + H * W * out_itemsize,
    )

    out = pl.pallas_call(
        grayscale_kernel,
        out_shape=jax.ShapeDtypeStruct((1, H, W), out_dtype),
        grid_spec=pltpu.PrefetchScalarGridSpec(
            num_scalar_prefetch=0,
            grid=grid,
            in_specs=[in_spec],
            out_specs=out_spec,
        ),
        compiler_params=pltpu.CompilerParams(
            dimension_semantics=("parallel",),  # megacore sharding on v7x
            vmem_limit_bytes=vmem_limit,
        ),
        cost_estimate=cost,
    )(img)
    return out


if __name__ == "__main__":
    key = jax.random.PRNGKey(0)

    # Test 1: aligned small image (3 channels, H=16, W=128).
    x = jax.random.normal(key, (3, 16, 128), dtype=jnp.float32)
    out = my_grayscale(x)
    jax.block_until_ready(out)
    ref = jnp.expand_dims(jnp.sum(x, axis=0) / 3.0, axis=0)
    assert out.shape == (1, 16, 128), out.shape
    assert out.dtype == x.dtype, out.dtype
    assert jnp.allclose(out, ref, atol=1e-5, rtol=1e-5), "mismatch vs reference (aligned)"

    # Test 2: awkward (non-128 / non-8-aligned) shape — exercises the unpadded
    # full-width block + partial boundary handling.
    x2 = jax.random.normal(jax.random.PRNGKey(1), (3, 20, 100), dtype=jnp.float32)
    out2 = my_grayscale(x2)
    jax.block_until_ready(out2)
    ref2 = jnp.expand_dims(jnp.sum(x2, axis=0) / 3.0, axis=0)
    assert out2.shape == (1, 20, 100), out2.shape
    assert jnp.allclose(out2, ref2, atol=1e-5, rtol=1e-5), "mismatch vs reference (unaligned)"

    print("KERNEL_OK")
</pallas_src>

<mosaic_0001>
module attributes {stable_mosaic.version = 11 : i64} {
  func.func @grayscale_kernel(%arg0: i32, %arg1: memref<3x8x128xf32, #tpu.memory_space<vmem>>, %arg2: memref<1x8x128xf32, #tpu.memory_space<vmem>>) attributes {dimension_semantics = [#tpu.dimension_semantics<parallel>], iteration_bounds = array<i64: 2>, scalar_prefetch = 0 : i64, scratch_operands = 0 : i64, tpu.core_type = #tpu.core_type<tc>, window_params = [{transform_indices = @transform_0, window_bounds = array<i64: 3, 8, 128>}, {transform_indices = @transform_1, window_bounds = array<i64: 1, 8, 128>}]} {
    %c0 = arith.constant 0 : index
    %c0_0 = arith.constant 0 : index
    %c0_1 = arith.constant 0 : index
    %0 = vector.load %arg1[%c0, %c0_0, %c0_1] : memref<3x8x128xf32, #tpu.memory_space<vmem>>, vector<3x8x128xf32>
    %cst = arith.constant dense<0.000000e+00> : vector<8x128xf32>
    %1 = vector.multi_reduction <add>, %0, %cst [0] : vector<3x8x128xf32> to vector<8x128xf32>
    %2 = vector.shape_cast %1 : vector<8x128xf32> to vector<1x8x128xf32>
    %cst_2 = arith.constant 3.000000e+00 : f32
    %3 = vector.broadcast %cst_2 : f32 to vector<1x8x128xf32>
    %4 = arith.divf %2, %3 : vector<1x8x128xf32>
    %c0_3 = arith.constant 0 : index
    %c0_4 = arith.constant 0 : index
    %c0_5 = arith.constant 0 : index
    %5 = vector.load %arg2[%c0_3, %c0_4, %c0_5] : memref<1x8x128xf32, #tpu.memory_space<vmem>>, vector<1x8x128xf32>
    tpu.vector_store %arg2[%c0_3, %c0_4, %c0_5], %4 {strides = array<i32>} : memref<1x8x128xf32, #tpu.memory_space<vmem>>, vector<1x8x128xf32>,
    return
  }
  func.func @transform_0(%arg0: i32) -> (i32, i32, i32) {
    %c0_i32 = arith.constant 0 : i32
    %c0_i32_0 = arith.constant 0 : i32
    %c0_i32_1 = arith.constant 0 : i32
    return %c0_i32, %arg0, %c0_i32_0 : i32, i32, i32
  }
  func.func @transform_1(%arg0: i32) -> (i32, i32, i32) {
    %c0_i32 = arith.constant 0 : i32
    %c0_i32_0 = arith.constant 0 : i32
    %c0_i32_1 = arith.constant 0 : i32
    return %c0_i32, %arg0, %c0_i32_0 : i32, i32, i32
  }
}

</mosaic_0001>

<llo_original>
// kernel: tpu_custom_call.1
$region0: #{tpu_custom_call.1}
  #allocation0 [shape = 'u32[]', space=smem, size = 0x4, offset = 0x4, fixed_abs, tag = 'smem constant byte address 0x4 - core index']
  #allocation1 [shape = 'u32[144,128]{1,0:T(1,128)}', space=vmem, size = 0x12000, scoped, tag = 'internal scratch']
  %s0 = inlined_call_operand.hbm [shape: f32[3,16,128], index: 0, kind: input, shape index: {}]
  %s1 = inlined_call_operand.hbm [shape: f32[1,16,128], index: 1, kind: output, shape index: {}]
  %s2 = sld [smem:[#allocation0]]
  $region41: #{tpu_custom_call.1} parent=0
    _
  %s4 = ssub.s32 1, %s2
  %s5 = scalar_select 0, %s4, %s2
  $region1: #{tpu_custom_call.1} parent=0
    #allocation2 [shape = 'u8[24576]{0}', space=vmem, size = 0x6000, scoped, tag = 'input window, operand 0']
    #allocation3 [shape = 's32[2]{0}', space=sflag, size = 0x8, scoped, tag = 'scoped memory for tpu_custom_call.1']
    #allocation4 [shape = 's32[2]{0}', space=sflag, size = 0x8, scoped, tag = 'scoped memory for tpu_custom_call.1']
    #allocation5 [shape = 'u8[8192]{0}', space=vmem, size = 0x2000, scoped, tag = 'output window, operand 0']
    %6 = vsyncpa [#allocation3], 0
    %s7 = scalar_lea.sflag [#allocation3], 1
    %8 = vsyncpa %s7, 0
    %9 = vsyncpa [#allocation4], 0
    %s10 = scalar_lea.sflag [#allocation4], 1
    %11 = vsyncpa %s10, 0
    loop: start=0, step=1, limit=4
    $region2: #{tpu_custom_call.1} parent=1 // loop_pre_header
      _
    $region3: #{tpu_custom_call.1} parent=1 // loop_header
      %s13 = sphi 0, %s17
      %p14 = scmp.ge.s32.totalorder %s13, 4
      %s23 = sphi 0, %s25
      %s26 = sphi 0, %s23
      %s27 = sphi 0, %s26
      %s43 = sphi 0, %s27
      %s49 = sphi 0, %s51
      %s52 = sphi 0, %s49
      %s53 = sphi 0, %s52
      %s69 = sphi 0, %s53
    $region4: #{tpu_custom_call.1} parent=1 // loop_header_branch
      %16 = sbr.rel (%p14) target = $region8
    $region5: #{tpu_custom_call.1} parent=1 // loop_body
      %s18 = ssub.s32 %s13, 1
      %s19 = ssub.s32 %s13, 2
      %s20 = sadd.s32 %s13, 1
      %s21 = ssub.s32 %s13, %s20
      %p22 = scmp.eq.s32.totalorder %s21, 0
      %s24 = sadd.s32 %s23, 1
      %s25 = scalar_select %p22, %s23, %s24
      %p28 = pneg %p22
      %p29 = scmp.eq.s32.totalorder %s13, 1
      %p30 = por %p28, %p29
      %p31 = scmp.ne.s32.totalorder %s23, %s26
      %p32 = scmp.eq.s32.totalorder %s13, 0
      %p33 = por %p31, %p32
      %p34 = scmp.ne.s32.totalorder %s23, %s26
      %p35 = scmp.eq.s32.totalorder %s18, 1
      %p36 = por %p34, %p35
      %p37 = scmp.ne.s32.totalorder %s26, %s27
      %p38 = scmp.eq.s32.totalorder %s18, 0
      %p39 = por %p37, %p38
      %p40 = scmp.ne.s32.totalorder %s26, %s27
      %p41 = scmp.eq.s32.totalorder %s19, 1
      %p42 = por %p40, %p41
      %p44 = scmp.ne.s32.totalorder %s27, %s43
      %p45 = scmp.eq.s32.totalorder %s19, 0
      %p46 = por %p44, %p45
      %s47 = ssub.s32 %s13, %s20
      %p48 = scmp.eq.s32.totalorder %s47, 0
      %s50 = sadd.s32 %s49, 1
      %s51 = scalar_select %p48, %s49, %s50
      %p54 = pneg %p48
      %p55 = scmp.eq.s32.totalorder %s13, 1
      %p56 = por %p54, %p55
      %p57 = scmp.ne.s32.totalorder %s49, %s52
      %p58 = scmp.eq.s32.totalorder %s13, 0
      %p59 = por %p57, %p58
      %p60 = scmp.ne.s32.totalorder %s49, %s52
      %p61 = scmp.eq.s32.totalorder %s18, 1
      %p62 = por %p60, %p61
      %p63 = scmp.ne.s32.totalorder %s52, %s53
      %p64 = scmp.eq.s32.totalorder %s18, 0
      %p65 = por %p63, %p64
      %p66 = scmp.ne.s32.totalorder %s52, %s53
      %p67 = scmp.eq.s32.totalorder %s19, 1
      %p68 = por %p66, %p67
      %p70 = scmp.ne.s32.totalorder %s53, %s69
      %p71 = scmp.eq.s32.totalorder %s19, 0
      %p72 = por %p70, %p71
      %p73 = scmp.le.s32.totalorder 1, %s13
      %p74 = scmp.lt.s32.totalorder %s13, 3
      %p75 = pnand %p73, %p74
      %p76 = pneg %p75
      // Predicated region
      $region9: #{tpu_custom_call.1} parent=5 // pred_check
        _
      $region10: #{tpu_custom_call.1} parent=5 // pred_check_branch
        %78 = sbr.rel (%p75) target = $region12
      $region11: #{tpu_custom_call.1} parent=5 // pred_region
        %s79 = ssub.s32 %s13, 1
      $region12: #{tpu_custom_call.1} parent=5 // pred_fallthru
        _
      %p80 = scmp.lt.s32.totalorder %s13, 2
      // Predicated region
      $region13: #{tpu_custom_call.1} parent=5 // pred_check
        %p81 = pneg %p80
      $region14: #{tpu_custom_call.1} parent=5 // pred_check_branch
        %83 = sbr.rel (%p81) target = $region16
      $region15: #{tpu_custom_call.1} parent=5 // pred_region
        // Predicated region
        $region17: #{tpu_custom_call.1} parent=15 // pred_check
          %p84 = pneg %p33
        $region18: #{tpu_custom_call.1} parent=15 // pred_check_branch
          %86 = sbr.rel (%p84) target = $region20
        $region19: #{tpu_custom_call.1} parent=15 // pred_region
          %s87 = sand.u32 %s23, 1
          %s88 = scalar_lea.sflag [#allocation3], %s87
          %s89 = sand.u32 %s23, 1
          %s90 = smul.addr %s89, 24
          %s91 = scalar_lea.vmem [#allocation2], %s90
          %s93 = ssub.s32 384, 384
          %94 = vsyncadd %s88, %s93
          %s95 = smul.addr %s13, 128
          %s96 = scalar_lea.hbm %s0, %s95
          %s97 = sshll.u32 %s91, 4
          %s98 = int_to_ptr.vmem [resolvable:$true] %s97
          %103 = dma.hbm_to_vmem [thread:$0]  %s96, 384, %s98, %s88, 256, 128, 8
        $region20: #{tpu_custom_call.1} parent=15 // pred_fallthru
          _
      $region16: #{tpu_custom_call.1} parent=5 // pred_fallthru
        _
      %p104 = scmp.le.s32.totalorder 1, %s13
      %p105 = scmp.lt.s32.totalorder %s13, 3
      %p106 = pnand %p104, %p105
      %p107 = pneg %p106
      // Predicated region
      $region21: #{tpu_custom_call.1} parent=5 // pred_check
        _
      $region22: #{tpu_custom_call.1} parent=5 // pred_check_branch
        %109 = sbr.rel (%p106) target = $region24
      $region23: #{tpu_custom_call.1} parent=5 // pred_region
        %s110 = ssub.s32 %s13, 1
        %s111 = sand.u32 %s26, 1
        %s112 = scalar_lea.sflag [#allocation3], %s111
        %s113 = sand.u32 %s26, 1
        %s114 = smul.addr %s113, 24
        %s115 = scalar_lea.vmem [#allocation2], %s114
        // Predicated region
        $region25: #{tpu_custom_call.1} parent=23 // pred_check
          %p116 = pneg %p39
        $region26: #{tpu_custom_call.1} parent=23 // pred_check_branch
          %118 = sbr.rel (%p116) target = $region28
        $region27: #{tpu_custom_call.1} parent=23 // pred_region
          %119 = dma.done %s112, 384
        $region28: #{tpu_custom_call.1} parent=23 // pred_fallthru
          _
        %s120 = sand.u32 %s26, 1
        %s121 = scalar_lea.sflag [#allocation3], %s120
        %s122 = sand.u32 %s26, 1
        %s123 = smul.addr %s122, 24
        %s124 = scalar_lea.vmem [#allocation2], %s123
        %p125 = pneg %p39
        %p126 = pneg %p36
        %p127 = pneg %p65
        %p128 = pneg %p62
        %s129 = sand.u32 %s52, 1
        %s130 = scalar_lea.sflag [#allocation4], %s129
        %s131 = sand.u32 %s52, 1
        %s132 = smul.addr %s131, 8
        %s133 = scalar_lea.vmem [#allocation5], %s132
        %v134 = vld [vmem:[%s115] sm:$0xff]
        %v135 = vld [vmem:[%s115 + $0x8] sm:$0xff]
        %v136 = vld [vmem:[%s115 + $0x10] sm:$0xff]
        %v137 = vadd.f32 %v134, %v135
        %v138 = vadd.f32 %v137, %v136
        %v139 = vrcp.pop 3.0
        %v140 = vmul.f32 %v138, %v139
        %141 = vst [vmem:[%s133] sm:$0xff] %v140
        %s142 = sand.u32 %s52, 1
        %s143 = scalar_lea.sflag [#allocation4], %s142
        %s144 = sand.u32 %s52, 1
        %s145 = smul.addr %s144, 8
        %s146 = scalar_lea.vmem [#allocation5], %s145
        // Predicated region
        $region29: #{tpu_custom_call.1} parent=23 // pred_check
          %p147 = pneg %p62
        $region30: #{tpu_custom_call.1} parent=23 // pred_check_branch
          %149 = sbr.rel (%p147) target = $region32
        $region31: #{tpu_custom_call.1} parent=23 // pred_region
          %s151 = ssub.s32 128, 128
          %152 = vsyncadd %s143, %s151
          %s153 = smul.addr %s18, 128
          %s154 = scalar_lea.hbm %s1, %s153
          %s156 = sshll.u32 %s146, 4
          %s157 = int_to_ptr.vmem [resolvable:$true] %s156
          %159 = dma.vmem_to_hbm [thread:$0]  %s157, 128, %s154, %s143
        $region32: #{tpu_custom_call.1} parent=23 // pred_fallthru
          _
      $region24: #{tpu_custom_call.1} parent=5 // pred_fallthru
        _
      %p160 = scmp.le.s32.totalorder 2, %s13
      // Predicated region
      $region33: #{tpu_custom_call.1} parent=5 // pred_check
        %p161 = pneg %p160
      $region34: #{tpu_custom_call.1} parent=5 // pred_check_branch
        %163 = sbr.rel (%p161) target = $region36
      $region35: #{tpu_custom_call.1} parent=5 // pred_region
        %s164 = ssub.s32 %s13, 2
        // Predicated region
        $region37: #{tpu_custom_call.1} parent=35 // pred_check
          %p165 = pneg %p68
        $region38: #{tpu_custom_call.1} parent=35 // pred_check_branch
          %167 = sbr.rel (%p165) target = $region40
        $region39: #{tpu_custom_call.1} parent=35 // pred_region
          %s168 = sand.u32 %s53, 1
          %s169 = scalar_lea.sflag [#allocation4], %s168
          %s170 = sand.u32 %s53, 1
          %s171 = smul.addr %s170, 8
          %s172 = scalar_lea.vmem [#allocation5], %s171
          %173 = dma.done %s169, 128
        $region40: #{tpu_custom_call.1} parent=35 // pred_fallthru
          _
      $region36: #{tpu_custom_call.1} parent=5 // pred_fallthru
        _
    $region6: #{tpu_custom_call.1} parent=1 // loop_footer
      %s17 = sadd.s32 1, %s13
    $region7: #{tpu_custom_call.1} parent=1 // loop_footer_branch
      %12 = sbr.rel target = $region3
    $region8: #{tpu_custom_call.1} parent=1 // loop_exit
      _
    %174 = vsyncpa [#allocation3], 1
    %s175 = scalar_lea.sflag [#allocation3], 1
    %176 = vsyncpa %s175, 1
    %177 = vsyncpa [#allocation4], 1
    %s178 = scalar_lea.sflag [#allocation4], 1
    %179 = vsyncpa %s178, 1

</llo_original>
